<compile_context>
chip_gen: v7x
topology: tpu7x:2x2x1
jax: 0.10.0
libtpu: 0.0.40
codegen_flags: <defaults>
</compile_context>

<pallas_src>
import functools

import jax
import jax.numpy as jnp
from jax.experimental import pallas as pl
from jax.experimental.pallas import tpu as pltpu


# ---------------------------------------------------------------------------
# Budgets (bytes).
# ---------------------------------------------------------------------------
_FUSED_BLOCK_BUDGET = 4 * 1024 * 1024   # (tb, C, L) slab; input+output double-buffered
_PASS1_BLOCK_BUDGET = 8 * 1024 * 1024   # squeeze: only the input block is double-buffered
_PASS2_BLOCK_BUDGET = 4 * 1024 * 1024   # excite: input + output double-buffered
_VMEM_LIMIT = 48 * 1024 * 1024          # <= v7x per-TC VMEM (64 MiB) with headroom

_WEIGHT_KEYS = ("w1", "b1", "w2", "b2", "wtrl", "btrl")


# ---------------------------------------------------------------------------
# Tiny gate MLP (shared by the fused kernel and the 2-pass fallback).
# ---------------------------------------------------------------------------
def _mm(a, w):
    """(rows, K) @ (K, N) as broadcast-multiply + reduce.

    Exact f32 on the VPU/XLU.  The gate matmuls are tiny (K, N ~ H = 8), so the
    MXU buys nothing and this keeps the numerics precision-unambiguous inside
    and outside the kernel.
    """
    return jnp.sum(a[:, :, None] * w[None, :, :].astype(jnp.float32), axis=1)


def _gate_mlp(y, w1, b1, w2, b2, wtrl, btrl, w3a, w3b, b3):
    """Linear -> SiLU -> Linear -> [concat TRL-bilinear] -> SiLU -> Linear -> Sigmoid."""
    y = y.astype(jnp.float32)
    h1 = jax.nn.silu(_mm(y, w1) + b1)
    h2 = _mm(h1, w2) + b2
    # TRL / Bilinear branch: z[b, o] = sum_{i,j} h2[b, i] * h2[b, j] * wtrl[i, j, o] + btrl
    hdim = wtrl.shape[0]
    z = jnp.zeros((h2.shape[0], wtrl.shape[-1]), jnp.float32)
    for i in range(hdim):                      # H is tiny (inp // reduction), static unroll
        z = z + h2[:, i:i + 1] * _mm(h2, wtrl[i])
    z = z + btrl
    # SiLU is elementwise: SiLU(concat([h2, z])) @ W3 == SiLU(h2) @ W3[:H] + SiLU(z) @ W3[H:]
    g = _mm(jax.nn.silu(h2), w3a) + _mm(jax.nn.silu(z), w3b) + b3
    return jax.nn.sigmoid(g)                   # (rows, C) f32 gate


# ---------------------------------------------------------------------------
# Fused single-pass kernel: squeeze + gate MLP + excite on one (tb, C, L) slab.
# ---------------------------------------------------------------------------
def _fused_kernel(x_ref, w1_ref, b1_ref, w2_ref, b2_ref, wtrl_ref, btrl_ref,
                  w3a_ref, w3b_ref, b3_ref, o_ref, *, inv_l):
    x = x_ref[...]                                             # (tb, C, L)
    y = jnp.sum(x.astype(jnp.float32), axis=-1) * inv_l        # squeeze: mean over the TRUE L
    gate = _gate_mlp(y, w1_ref[...], b1_ref[...], w2_ref[...], b2_ref[...],
                     wtrl_ref[...], btrl_ref[...],
                     w3a_ref[...], w3b_ref[...], b3_ref[...])  # (tb, C) f32
    # f32 gate, cast only the product (review's bf16 correctness note).
    o_ref[...] = (x.astype(jnp.float32) * gate[:, :, None]).astype(o_ref.dtype)


# ---------------------------------------------------------------------------
# Fallback pass 1: tiled mean over L on the flat (B*C, L) view (P3 accumulator).
# ---------------------------------------------------------------------------
def _squeeze_kernel(x_ref, sum_ref, *, inv_l):
    li = pl.program_id(1)

    @pl.when(li == 0)
    def _():
        sum_ref[...] = jnp.zeros_like(sum_ref)

    sum_ref[...] += jnp.sum(x_ref[...].astype(jnp.float32), axis=-1, keepdims=True)

    @pl.when(li == pl.num_programs(1) - 1)
    def _():
        sum_ref[...] = sum_ref[...] * inv_l


# ---------------------------------------------------------------------------
# Fallback pass 2: streaming excite; gate block is (tr, 1) -> per-row lane splat.
# ---------------------------------------------------------------------------
def _excite_kernel(gate_ref, x_ref, o_ref):
    o_ref[...] = (x_ref[...].astype(jnp.float32) * gate_ref[...]).astype(o_ref.dtype)


# ---------------------------------------------------------------------------
# Tile selection (VMEM-budget checked; tiles always divide the true dims).
# ---------------------------------------------------------------------------
def _pick_batch_tile(b, slab_bytes, budget):
    """Largest divisor of b whose slab fits `budget`; keep >= 2 grid steps when
    b >= 2 so both v7x TensorCores get work."""
    for cand in range(b, 0, -1):
        if b % cand:
            continue
        if cand * slab_bytes > budget:
            continue
        if b >= 2 and cand == b:
            continue
        return cand
    return 1


def _pick_row_tile(rows, itemsize):
    """Sublane-friendly row tile for the flat (B*C, L) view."""
    gran = {4: 8, 2: 16, 1: 32}.get(itemsize, 8)
    for tr in (256, 128, 64, 32, 16, 8):
        if tr % gran == 0 and rows % tr == 0:
            return tr
    return rows          # full dim is always a legal block


def _pick_lane_tile(l, tr, itemsize, budget):
    """Largest lane tile (multiple of 128, or the full axis) within `budget`."""
    if tr * l * itemsize <= budget:
        return l
    if l % 128 == 0:
        max_t = max(128, (budget // (tr * itemsize)) // 128 * 128)
        for t in range(min(max_t, l), 127, -128):
            if l % t == 0:
                return t
        return 128
    # TODO(synk): awkward L (not a multiple of 128 and larger than the budget):
    # take the whole axis as one block; pipelining gets shallower but stays correct.
    return l


def _zero_map(*_args, ndim):
    return (0,) * ndim


# ---------------------------------------------------------------------------
# Wrapper
# ---------------------------------------------------------------------------
def _se_fused(x, weights, donate_x):
    b, c, l = x.shape
    itemsize = x.dtype.itemsize
    tb = _pick_batch_tile(b, c * l * itemsize, _FUSED_BLOCK_BUDGET)

    x_spec = pl.BlockSpec((tb, c, l), lambda bi: (bi, 0, 0))
    w_specs = [pl.BlockSpec(w.shape, functools.partial(_zero_map, ndim=w.ndim))
               for w in weights]

    return pl.pallas_call(
        functools.partial(_fused_kernel, inv_l=1.0 / l),
        out_shape=jax.ShapeDtypeStruct((b, c, l), x.dtype),
        grid_spec=pltpu.PrefetchScalarGridSpec(
            num_scalar_prefetch=0,
            grid=(b // tb,),
            in_specs=[x_spec] + w_specs,
            out_specs=pl.BlockSpec((tb, c, l), lambda bi: (bi, 0, 0)),
        ),
        input_output_aliases=({0: 0} if donate_x else {}),
        compiler_params=pltpu.CompilerParams(
            dimension_semantics=("parallel",),
            vmem_limit_bytes=_VMEM_LIMIT,
        ),
    )(x, *weights)


def _se_two_pass(x, weights, donate_x):
    b, c, l = x.shape
    rows = b * c
    itemsize = x.dtype.itemsize
    xr = x.reshape(rows, l)                      # free view for contiguous NCL

    tr = _pick_row_tile(rows, itemsize)
    tl1 = _pick_lane_tile(l, tr, itemsize, _PASS1_BLOCK_BUDGET)
    tl2 = _pick_lane_tile(l, tr, itemsize, _PASS2_BLOCK_BUDGET)

    # Pass 1: tiled mean over L (f32 accumulate; reduction axis last, "arbitrary").
    pooled = pl.pallas_call(
        functools.partial(_squeeze_kernel, inv_l=1.0 / l),
        out_shape=jax.ShapeDtypeStruct((rows, 1), jnp.float32),
        grid_spec=pltpu.PrefetchScalarGridSpec(
            num_scalar_prefetch=0,
            grid=(rows // tr, l // tl1),
            in_specs=[pl.BlockSpec((tr, tl1), lambda ri, li: (ri, li))],
            out_specs=pl.BlockSpec((tr, 1), lambda ri, li: (ri, 0)),
        ),
        compiler_params=pltpu.CompilerParams(
            dimension_semantics=("parallel", "arbitrary"),
            vmem_limit_bytes=_VMEM_LIMIT,
        ),
    )(xr)

    # Tiny gate MLP on the pooled (B, C) vector (plain JAX, off the streamed path).
    gate = _gate_mlp(pooled.reshape(b, c), *weights)          # (B, C) f32
    gate_rows = gate.reshape(rows, 1)                         # stays f32

    # Pass 2: streaming excite on the flat (rows, L) view; per-row gate splat.
    out = pl.pallas_call(
        _excite_kernel,
        out_shape=jax.ShapeDtypeStruct((rows, l), x.dtype),
        grid_spec=pltpu.PrefetchScalarGridSpec(
            num_scalar_prefetch=0,
            grid=(rows // tr, l // tl2),
            in_specs=[pl.BlockSpec((tr, 1), lambda ri, li: (ri, 0)),
                      pl.BlockSpec((tr, tl2), lambda ri, li: (ri, li))],
            out_specs=pl.BlockSpec((tr, tl2), lambda ri, li: (ri, li)),
        ),
        input_output_aliases=({1: 0} if donate_x else {}),
        compiler_params=pltpu.CompilerParams(
            dimension_semantics=("parallel", "parallel"),
            vmem_limit_bytes=_VMEM_LIMIT,
        ),
    )(gate_rows, xr)
    return out.reshape(b, c, l)


def se_layer(x, params, *, force_two_pass=False, donate_x=False):
    """SELayer forward.  x: (B, C, L); params: dict from init_params."""
    b, c, l = x.shape
    hdim = params["wtrl"].shape[0]
    w3a, w3b = params["w3"][:hdim], params["w3"][hdim:]       # pre-split (wrapper-side)
    weights = tuple(params[k] for k in _WEIGHT_KEYS) + (w3a, w3b, params["b3"])

    slab_bytes = c * l * x.dtype.itemsize
    if (not force_two_pass) and slab_bytes <= _FUSED_BLOCK_BUDGET:
        return _se_fused(x, weights, donate_x)
    return _se_two_pass(x, weights, donate_x)


# ---------------------------------------------------------------------------
# Parameters & pure-JAX reference
# ---------------------------------------------------------------------------
def init_params(key, inp, oup, reduction=4):
    h = inp // reduction          # middle width
    m = h // 2                    # bilinear output width
    ks = jax.random.split(key, 8)
    return {
        "w1": jax.random.normal(ks[0], (oup, h), jnp.float32) * 0.2,
        "b1": jax.random.normal(ks[1], (1, h), jnp.float32) * 0.1,
        "w2": jax.random.normal(ks[2], (h, h), jnp.float32) * 0.2,
        "b2": jax.random.normal(ks[3], (1, h), jnp.float32) * 0.1,
        # Full (H, H, M) TRL weight; the rank=0.5 Tucker factorization is just a
        # parameterization of the same forward map.  std matches .normal_(std=0.00075).
        "wtrl": jax.random.normal(ks[4], (h, h, m), jnp.float32) * 0.00075,
        "btrl": jax.random.normal(ks[5], (1, m), jnp.float32) * 0.1,
        "w3": jax.random.normal(ks[6], (h + m, oup), jnp.float32) * 0.2,
        "b3": jax.random.normal(ks[7], (1, oup), jnp.float32) * 0.1,
    }


def se_layer_ref(x, p):
    """Independent pure-JAX mirror of the PyTorch forward (for the correctness check)."""
    y = jnp.mean(x, axis=2)
    h1 = jax.nn.silu(y @ p["w1"] + p["b1"])
    h2 = h1 @ p["w2"] + p["b2"]
    z = jnp.einsum("bi,bj,ijo->bo", h2, h2, p["wtrl"]) + p["btrl"]
    h3 = jax.nn.silu(jnp.concatenate([h2, z], axis=-1))
    gate = jax.nn.sigmoid(h3 @ p["w3"] + p["b3"])
    return x * gate[:, :, None]


if __name__ == "__main__":
    # Full-precision matmuls for the tiny reference gate math; the Pallas kernels'
    # gate math is exact-f32 by construction, so this only affects the reference.
    jax.config.update("jax_default_matmul_precision", "highest")

    # Small shapes consistent with the module: inp=32, oup=C=8, reduction=4.
    B, C, L = 2, 8, 16
    inp, oup = 32, C

    key = jax.random.PRNGKey(0)
    kx, kp = jax.random.split(key)
    x = jax.random.normal(kx, (B, C, L), jnp.float32)
    params = init_params(kp, inp, oup)

    ref = se_layer_ref(x, params)

    # Primary fused single-pass path.
    out = jax.block_until_ready(se_layer(x, params))
    assert out.shape == (B, C, L)
    assert jnp.allclose(out, ref, rtol=1e-4, atol=1e-4), float(jnp.max(jnp.abs(out - ref)))

    # Fallback streaming 2-pass path (exercised explicitly for coverage).
    out2 = jax.block_until_ready(se_layer(x, params, force_two_pass=True))
    assert jnp.allclose(out2, ref, rtol=1e-4, atol=1e-4), float(jnp.max(jnp.abs(out2 - ref)))

    print("KERNEL_OK")
</pallas_src>

<mosaic_0001>
module attributes {stable_mosaic.version = 11 : i64} {
  func.func @_fused_kernel(%arg0: i32, %arg1: memref<1x8x16xf32, #tpu.memory_space<vmem>>, %arg2: memref<8x8xf32, #tpu.memory_space<vmem>>, %arg3: memref<1x8xf32, #tpu.memory_space<vmem>>, %arg4: memref<8x8xf32, #tpu.memory_space<vmem>>, %arg5: memref<1x8xf32, #tpu.memory_space<vmem>>, %arg6: memref<8x8x4xf32, #tpu.memory_space<vmem>>, %arg7: memref<1x4xf32, #tpu.memory_space<vmem>>, %arg8: memref<8x8xf32, #tpu.memory_space<vmem>>, %arg9: memref<4x8xf32, #tpu.memory_space<vmem>>, %arg10: memref<1x8xf32, #tpu.memory_space<vmem>>, %arg11: memref<1x8x16xf32, #tpu.memory_space<vmem>>) attributes {dimension_semantics = [#tpu.dimension_semantics<parallel>], iteration_bounds = array<i64: 2>, scalar_prefetch = 0 : i64, scratch_operands = 0 : i64, tpu.core_type = #tpu.core_type<tc>, window_params = [{transform_indices = @transform_0, window_bounds = array<i64: 1, 8, 16>}, {pipeline_mode = #tpu.pipeline_mode<synchronous>, transform_indices = @transform_1, window_bounds = array<i64: 8, 8>}, {pipeline_mode = #tpu.pipeline_mode<synchronous>, transform_indices = @transform_2, window_bounds = array<i64: 1, 8>}, {pipeline_mode = #tpu.pipeline_mode<synchronous>, transform_indices = @transform_3, window_bounds = array<i64: 8, 8>}, {pipeline_mode = #tpu.pipeline_mode<synchronous>, transform_indices = @transform_4, window_bounds = array<i64: 1, 8>}, {pipeline_mode = #tpu.pipeline_mode<synchronous>, transform_indices = @transform_5, window_bounds = array<i64: 8, 8, 4>}, {pipeline_mode = #tpu.pipeline_mode<synchronous>, transform_indices = @transform_6, window_bounds = array<i64: 1, 4>}, {pipeline_mode = #tpu.pipeline_mode<synchronous>, transform_indices = @transform_7, window_bounds = array<i64: 8, 8>}, {pipeline_mode = #tpu.pipeline_mode<synchronous>, transform_indices = @transform_8, window_bounds = array<i64: 4, 8>}, {pipeline_mode = #tpu.pipeline_mode<synchronous>, transform_indices = @transform_9, window_bounds = array<i64: 1, 8>}, {transform_indices = @transform_10, window_bounds = array<i64: 1, 8, 16>}]} {
    %c0 = arith.constant 0 : index
    %c0_0 = arith.constant 0 : index
    %c0_1 = arith.constant 0 : index
    %0 = vector.load %arg1[%c0, %c0_0, %c0_1] : memref<1x8x16xf32, #tpu.memory_space<vmem>>, vector<1x8x16xf32>
    %cst = arith.constant dense<0.000000e+00> : vector<1x8xf32>
    %1 = vector.multi_reduction <add>, %0, %cst [2] : vector<1x8x16xf32> to vector<1x8xf32>
    %cst_2 = arith.constant 6.250000e-02 : f32
    %2 = vector.broadcast %cst_2 : f32 to vector<1x8xf32>
    %3 = arith.mulf %1, %2 : vector<1x8xf32>
    %c0_3 = arith.constant 0 : index
    %c0_4 = arith.constant 0 : index
    %4 = vector.load %arg2[%c0_3, %c0_4] : memref<8x8xf32, #tpu.memory_space<vmem>>, vector<8x8xf32>
    %c0_5 = arith.constant 0 : index
    %c0_6 = arith.constant 0 : index
    %5 = vector.load %arg3[%c0_5, %c0_6] : memref<1x8xf32, #tpu.memory_space<vmem>>, vector<1x8xf32>
    %c0_7 = arith.constant 0 : index
    %c0_8 = arith.constant 0 : index
    %6 = vector.load %arg4[%c0_7, %c0_8] : memref<8x8xf32, #tpu.memory_space<vmem>>, vector<8x8xf32>
    %c0_9 = arith.constant 0 : index
    %c0_10 = arith.constant 0 : index
    %7 = vector.load %arg5[%c0_9, %c0_10] : memref<1x8xf32, #tpu.memory_space<vmem>>, vector<1x8xf32>
    %c0_11 = arith.constant 0 : index
    %c0_12 = arith.constant 0 : index
    %c0_13 = arith.constant 0 : index
    %8 = vector.load %arg6[%c0_11, %c0_12, %c0_13] : memref<8x8x4xf32, #tpu.memory_space<vmem>>, vector<8x8x4xf32>
    %c0_14 = arith.constant 0 : index
    %c0_15 = arith.constant 0 : index
    %9 = vector.load %arg7[%c0_14, %c0_15] : memref<1x4xf32, #tpu.memory_space<vmem>>, vector<1x4xf32>
    %c0_16 = arith.constant 0 : index
    %c0_17 = arith.constant 0 : index
    %10 = vector.load %arg8[%c0_16, %c0_17] : memref<8x8xf32, #tpu.memory_space<vmem>>, vector<8x8xf32>
    %c0_18 = arith.constant 0 : index
    %c0_19 = arith.constant 0 : index
    %11 = vector.load %arg9[%c0_18, %c0_19] : memref<4x8xf32, #tpu.memory_space<vmem>>, vector<4x8xf32>
    %c0_20 = arith.constant 0 : index
    %c0_21 = arith.constant 0 : index
    %12 = vector.load %arg10[%c0_20, %c0_21] : memref<1x8xf32, #tpu.memory_space<vmem>>, vector<1x8xf32>
    %13 = vector.shape_cast %3 : vector<1x8xf32> to vector<1x8x1xf32>
    %14 = vector.shape_cast %4 : vector<8x8xf32> to vector<1x8x8xf32>
    %15 = vector.broadcast %13 : vector<1x8x1xf32> to vector<1x8x8xf32>
    %16 = arith.mulf %15, %14 : vector<1x8x8xf32>
    %cst_22 = arith.constant dense<0.000000e+00> : vector<1x8xf32>
    %17 = vector.multi_reduction <add>, %16, %cst_22 [1] : vector<1x8x8xf32> to vector<1x8xf32>
    %18 = arith.addf %17, %5 : vector<1x8xf32>
    %19 = arith.negf %18 : vector<1x8xf32>
    %20 = math.exp %19 : vector<1x8xf32>
    %cst_23 = arith.constant 1.000000e+00 : f32
    %21 = vector.broadcast %cst_23 : f32 to vector<1x8xf32>
    %22 = arith.addf %21, %20 : vector<1x8xf32>
    %23 = arith.divf %21, %22 : vector<1x8xf32>
    %24 = arith.mulf %18, %23 : vector<1x8xf32>
    %25 = vector.shape_cast %24 : vector<1x8xf32> to vector<1x8x1xf32>
    %26 = vector.shape_cast %6 : vector<8x8xf32> to vector<1x8x8xf32>
    %27 = vector.broadcast %25 : vector<1x8x1xf32> to vector<1x8x8xf32>
    %28 = arith.mulf %27, %26 : vector<1x8x8xf32>
    %cst_24 = arith.constant dense<0.000000e+00> : vector<1x8xf32>
    %29 = vector.multi_reduction <add>, %28, %cst_24 [1] : vector<1x8x8xf32> to vector<1x8xf32>
    %30 = arith.addf %29, %7 : vector<1x8xf32>
    %cst_25 = arith.constant 0.000000e+00 : f32
    %31 = vector.broadcast %cst_25 : f32 to vector<1x4xf32>
    %32 = vector.extract_strided_slice %30 {offsets = [0, 0], sizes = [1, 1], strides = [1, 1]} : vector<1x8xf32> to vector<1x1xf32>
    %33 = vector.extract_strided_slice %8 {offsets = [0, 0, 0], sizes = [1, 8, 4], strides = [1, 1, 1]} : vector<8x8x4xf32> to vector<1x8x4xf32>
    %34 = vector.shape_cast %33 : vector<1x8x4xf32> to vector<8x4xf32>
    %35 = vector.shape_cast %30 : vector<1x8xf32> to vector<1x8x1xf32>
    %36 = vector.shape_cast %34 : vector<8x4xf32> to vector<1x8x4xf32>
    %37 = vector.broadcast %35 : vector<1x8x1xf32> to vector<1x8x4xf32>
    %38 = arith.mulf %37, %36 : vector<1x8x4xf32>
    %cst_26 = arith.constant dense<0.000000e+00> : vector<1x4xf32>
    %39 = vector.multi_reduction <add>, %38, %cst_26 [1] : vector<1x8x4xf32> to vector<1x4xf32>
    %40 = vector.broadcast %32 : vector<1x1xf32> to vector<1x4xf32>
    %41 = arith.mulf %40, %39 : vector<1x4xf32>
    %42 = arith.addf %31, %41 : vector<1x4xf32>
    %43 = vector.extract_strided_slice %30 {offsets = [0, 1], sizes = [1, 1], strides = [1, 1]} : vector<1x8xf32> to vector<1x1xf32>
    %44 = vector.extract_strided_slice %8 {offsets = [1, 0, 0], sizes = [1, 8, 4], strides = [1, 1, 1]} : vector<8x8x4xf32> to vector<1x8x4xf32>
    %45 = vector.shape_cast %44 : vector<1x8x4xf32> to vector<8x4xf32>
    %46 = vector.shape_cast %30 : vector<1x8xf32> to vector<1x8x1xf32>
    %47 = vector.shape_cast %45 : vector<8x4xf32> to vector<1x8x4xf32>
    %48 = vector.broadcast %46 : vector<1x8x1xf32> to vector<1x8x4xf32>
    %49 = arith.mulf %48, %47 : vector<1x8x4xf32>
    %cst_27 = arith.constant dense<0.000000e+00> : vector<1x4xf32>
    %50 = vector.multi_reduction <add>, %49, %cst_27 [1] : vector<1x8x4xf32> to vector<1x4xf32>
    %51 = vector.broadcast %43 : vector<1x1xf32> to vector<1x4xf32>
    %52 = arith.mulf %51, %50 : vector<1x4xf32>
    %53 = arith.addf %42, %52 : vector<1x4xf32>
    %54 = vector.extract_strided_slice %30 {offsets = [0, 2], sizes = [1, 1], strides = [1, 1]} : vector<1x8xf32> to vector<1x1xf32>
    %55 = vector.extract_strided_slice %8 {offsets = [2, 0, 0], sizes = [1, 8, 4], strides = [1, 1, 1]} : vector<8x8x4xf32> to vector<1x8x4xf32>
    %56 = vector.shape_cast %55 : vector<1x8x4xf32> to vector<8x4xf32>
    %57 = vector.shape_cast %30 : vector<1x8xf32> to vector<1x8x1xf32>
    %58 = vector.shape_cast %56 : vector<8x4xf32> to vector<1x8x4xf32>
    %59 = vector.broadcast %57 : vector<1x8x1xf32> to vector<1x8x4xf32>
    %60 = arith.mulf %59, %58 : vector<1x8x4xf32>
    %cst_28 = arith.constant dense<0.000000e+00> : vector<1x4xf32>
    %61 = vector.multi_reduction <add>, %60, %cst_28 [1] : vector<1x8x4xf32> to vector<1x4xf32>
    %62 = vector.broadcast %54 : vector<1x1xf32> to vector<1x4xf32>
    %63 = arith.mulf %62, %61 : vector<1x4xf32>
    %64 = arith.addf %53, %63 : vector<1x4xf32>
    %65 = vector.extract_strided_slice %30 {offsets = [0, 3], sizes = [1, 1], strides = [1, 1]} : vector<1x8xf32> to vector<1x1xf32>
    %66 = vector.extract_strided_slice %8 {offsets = [3, 0, 0], sizes = [1, 8, 4], strides = [1, 1, 1]} : vector<8x8x4xf32> to vector<1x8x4xf32>
    %67 = vector.shape_cast %66 : vector<1x8x4xf32> to vector<8x4xf32>
    %68 = vector.shape_cast %30 : vector<1x8xf32> to vector<1x8x1xf32>
    %69 = vector.shape_cast %67 : vector<8x4xf32> to vector<1x8x4xf32>
    %70 = vector.broadcast %68 : vector<1x8x1xf32> to vector<1x8x4xf32>
    %71 = arith.mulf %70, %69 : vector<1x8x4xf32>
    %cst_29 = arith.constant dense<0.000000e+00> : vector<1x4xf32>
    %72 = vector.multi_reduction <add>, %71, %cst_29 [1] : vector<1x8x4xf32> to vector<1x4xf32>
    %73 = vector.broadcast %65 : vector<1x1xf32> to vector<1x4xf32>
    %74 = arith.mulf %73, %72 : vector<1x4xf32>
    %75 = arith.addf %64, %74 : vector<1x4xf32>
    %76 = vector.extract_strided_slice %30 {offsets = [0, 4], sizes = [1, 1], strides = [1, 1]} : vector<1x8xf32> to vector<1x1xf32>
    %77 = vector.extract_strided_slice %8 {offsets = [4, 0, 0], sizes = [1, 8, 4], strides = [1, 1, 1]} : vector<8x8x4xf32> to vector<1x8x4xf32>
    %78 = vector.shape_cast %77 : vector<1x8x4xf32> to vector<8x4xf32>
    %79 = vector.shape_cast %30 : vector<1x8xf32> to vector<1x8x1xf32>
    %80 = vector.shape_cast %78 : vector<8x4xf32> to vector<1x8x4xf32>
    %81 = vector.broadcast %79 : vector<1x8x1xf32> to vector<1x8x4xf32>
    %82 = arith.mulf %81, %80 : vector<1x8x4xf32>
    %cst_30 = arith.constant dense<0.000000e+00> : vector<1x4xf32>
    %83 = vector.multi_reduction <add>, %82, %cst_30 [1] : vector<1x8x4xf32> to vector<1x4xf32>
    %84 = vector.broadcast %76 : vector<1x1xf32> to vector<1x4xf32>
    %85 = arith.mulf %84, %83 : vector<1x4xf32>
    %86 = arith.addf %75, %85 : vector<1x4xf32>
    %87 = vector.extract_strided_slice %30 {offsets = [0, 5], sizes = [1, 1], strides = [1, 1]} : vector<1x8xf32> to vector<1x1xf32>
    %88 = vector.extract_strided_slice %8 {offsets = [5, 0, 0], sizes = [1, 8, 4], strides = [1, 1, 1]} : vector<8x8x4xf32> to vector<1x8x4xf32>
    %89 = vector.shape_cast %88 : vector<1x8x4xf32> to vector<8x4xf32>
    %90 = vector.shape_cast %30 : vector<1x8xf32> to vector<1x8x1xf32>
    %91 = vector.shape_cast %89 : vector<8x4xf32> to vector<1x8x4xf32>
    %92 = vector.broadcast %90 : vector<1x8x1xf32> to vector<1x8x4xf32>
    %93 = arith.mulf %92, %91 : vector<1x8x4xf32>
    %cst_31 = arith.constant dense<0.000000e+00> : vector<1x4xf32>
    %94 = vector.multi_reduction <add>, %93, %cst_31 [1] : vector<1x8x4xf32> to vector<1x4xf32>
    %95 = vector.broadcast %87 : vector<1x1xf32> to vector<1x4xf32>
    %96 = arith.mulf %95, %94 : vector<1x4xf32>
    %97 = arith.addf %86, %96 : vector<1x4xf32>
    %98 = vector.extract_strided_slice %30 {offsets = [0, 6], sizes = [1, 1], strides = [1, 1]} : vector<1x8xf32> to vector<1x1xf32>
    %99 = vector.extract_strided_slice %8 {offsets = [6, 0, 0], sizes = [1, 8, 4], strides = [1, 1, 1]} : vector<8x8x4xf32> to vector<1x8x4xf32>
    %100 = vector.shape_cast %99 : vector<1x8x4xf32> to vector<8x4xf32>
    %101 = vector.shape_cast %30 : vector<1x8xf32> to vector<1x8x1xf32>
    %102 = vector.shape_cast %100 : vector<8x4xf32> to vector<1x8x4xf32>
    %103 = vector.broadcast %101 : vector<1x8x1xf32> to vector<1x8x4xf32>
    %104 = arith.mulf %103, %102 : vector<1x8x4xf32>
    %cst_32 = arith.constant dense<0.000000e+00> : vector<1x4xf32>
    %105 = vector.multi_reduction <add>, %104, %cst_32 [1] : vector<1x8x4xf32> to vector<1x4xf32>
    %106 = vector.broadcast %98 : vector<1x1xf32> to vector<1x4xf32>
    %107 = arith.mulf %106, %105 : vector<1x4xf32>
    %108 = arith.addf %97, %107 : vector<1x4xf32>
    %109 = vector.extract_strided_slice %30 {offsets = [0, 7], sizes = [1, 1], strides = [1, 1]} : vector<1x8xf32> to vector<1x1xf32>
    %110 = vector.extract_strided_slice %8 {offsets = [7, 0, 0], sizes = [1, 8, 4], strides = [1, 1, 1]} : vector<8x8x4xf32> to vector<1x8x4xf32>
    %111 = vector.shape_cast %110 : vector<1x8x4xf32> to vector<8x4xf32>
    %112 = vector.shape_cast %30 : vector<1x8xf32> to vector<1x8x1xf32>
    %113 = vector.shape_cast %111 : vector<8x4xf32> to vector<1x8x4xf32>
    %114 = vector.broadcast %112 : vector<1x8x1xf32> to vector<1x8x4xf32>
    %115 = arith.mulf %114, %113 : vector<1x8x4xf32>
    %cst_33 = arith.constant dense<0.000000e+00> : vector<1x4xf32>
    %116 = vector.multi_reduction <add>, %115, %cst_33 [1] : vector<1x8x4xf32> to vector<1x4xf32>
    %117 = vector.broadcast %109 : vector<1x1xf32> to vector<1x4xf32>
    %118 = arith.mulf %117, %116 : vector<1x4xf32>
    %119 = arith.addf %108, %118 : vector<1x4xf32>
    %120 = arith.addf %119, %9 : vector<1x4xf32>
    %121 = arith.negf %30 : vector<1x8xf32>
    %122 = math.exp %121 : vector<1x8xf32>
    %cst_34 = arith.constant 1.000000e+00 : f32
    %123 = vector.broadcast %cst_34 : f32 to vector<1x8xf32>
    %124 = arith.addf %123, %122 : vector<1x8xf32>
    %125 = arith.divf %123, %124 : vector<1x8xf32>
    %126 = arith.mulf %30, %125 : vector<1x8xf32>
    %127 = vector.shape_cast %126 : vector<1x8xf32> to vector<1x8x1xf32>
    %128 = vector.shape_cast %10 : vector<8x8xf32> to vector<1x8x8xf32>
    %129 = vector.broadcast %127 : vector<1x8x1xf32> to vector<1x8x8xf32>
    %130 = arith.mulf %129, %128 : vector<1x8x8xf32>
    %cst_35 = arith.constant dense<0.000000e+00> : vector<1x8xf32>
    %131 = vector.multi_reduction <add>, %130, %cst_35 [1] : vector<1x8x8xf32> to vector<1x8xf32>
    %132 = arith.negf %120 : vector<1x4xf32>
    %133 = math.exp %132 : vector<1x4xf32>
    %cst_36 = arith.constant 1.000000e+00 : f32
    %134 = vector.broadcast %cst_36 : f32 to vector<1x4xf32>
    %135 = arith.addf %134, %133 : vector<1x4xf32>
    %136 = arith.divf %134, %135 : vector<1x4xf32>
    %137 = arith.mulf %120, %136 : vector<1x4xf32>
    %138 = vector.shape_cast %137 : vector<1x4xf32> to vector<1x4x1xf32>
    %139 = vector.shape_cast %11 : vector<4x8xf32> to vector<1x4x8xf32>
    %140 = vector.broadcast %138 : vector<1x4x1xf32> to vector<1x4x8xf32>
    %141 = arith.mulf %140, %139 : vector<1x4x8xf32>
    %cst_37 = arith.constant dense<0.000000e+00> : vector<1x8xf32>
    %142 = vector.multi_reduction <add>, %141, %cst_37 [1] : vector<1x4x8xf32> to vector<1x8xf32>
    %143 = arith.addf %131, %142 : vector<1x8xf32>
    %144 = arith.addf %143, %12 : vector<1x8xf32>
    %145 = arith.negf %144 : vector<1x8xf32>
    %146 = math.exp %145 : vector<1x8xf32>
    %cst_38 = arith.constant 1.000000e+00 : f32
    %147 = vector.broadcast %cst_38 : f32 to vector<1x8xf32>
    %148 = arith.addf %147, %146 : vector<1x8xf32>
    %149 = arith.divf %147, %148 : vector<1x8xf32>
    %150 = vector.shape_cast %149 : vector<1x8xf32> to vector<1x8x1xf32>
    %151 = vector.broadcast %150 : vector<1x8x1xf32> to vector<1x8x16xf32>
    %152 = arith.mulf %0, %151 : vector<1x8x16xf32>
    %c0_39 = arith.constant 0 : index
    %c0_40 = arith.constant 0 : index
    %c0_41 = arith.constant 0 : index
    %153 = vector.load %arg11[%c0_39, %c0_40, %c0_41] : memref<1x8x16xf32, #tpu.memory_space<vmem>>, vector<1x8x16xf32>
    tpu.vector_store %arg11[%c0_39, %c0_40, %c0_41], %152 {strides = array<i32>} : memref<1x8x16xf32, #tpu.memory_space<vmem>>, vector<1x8x16xf32>,
    return
  }
  func.func @transform_0(%arg0: i32) -> (i32, i32, i32) {
    %c0_i32 = arith.constant 0 : i32
    %c0_i32_0 = arith.constant 0 : i32
    %c0_i32_1 = arith.constant 0 : i32
    return %arg0, %c0_i32, %c0_i32_0 : i32, i32, i32
  }
  func.func @transform_1(%arg0: i32) -> (i32, i32) {
    %c0_i32 = arith.constant 0 : i32
    %c0_i32_0 = arith.constant 0 : i32
    %c0_i32_1 = arith.constant 0 : i32
    return %c0_i32, %c0_i32_0 : i32, i32
  }
  func.func @transform_2(%arg0: i32) -> (i32, i32) {
    %c0_i32 = arith.constant 0 : i32
    %c0_i32_0 = arith.constant 0 : i32
    %c0_i32_1 = arith.constant 0 : i32
    return %c0_i32, %c0_i32_0 : i32, i32
  }
  func.func @transform_3(%arg0: i32) -> (i32, i32) {
    %c0_i32 = arith.constant 0 : i32
    %c0_i32_0 = arith.constant 0 : i32
    %c0_i32_1 = arith.constant 0 : i32
    return %c0_i32, %c0_i32_0 : i32, i32
  }
  func.func @transform_4(%arg0: i32) -> (i32, i32) {
    %c0_i32 = arith.constant 0 : i32
    %c0_i32_0 = arith.constant 0 : i32
    %c0_i32_1 = arith.constant 0 : i32
    return %c0_i32, %c0_i32_0 : i32, i32
  }
  func.func @transform_5(%arg0: i32) -> (i32, i32, i32) {
    %c0_i32 = arith.constant 0 : i32
    %c0_i32_0 = arith.constant 0 : i32
    %c0_i32_1 = arith.constant 0 : i32
    %c0_i32_2 = arith.constant 0 : i32
    return %c0_i32, %c0_i32_0, %c0_i32_1 : i32, i32, i32
  }
  func.func @transform_6(%arg0: i32) -> (i32, i32) {
    %c0_i32 = arith.constant 0 : i32
    %c0_i32_0 = arith.constant 0 : i32
    %c0_i32_1 = arith.constant 0 : i32
    return %c0_i32, %c0_i32_0 : i32, i32
  }
  func.func @transform_7(%arg0: i32) -> (i32, i32) {
    %c0_i32 = arith.constant 0 : i32
    %c0_i32_0 = arith.constant 0 : i32
    %c0_i32_1 = arith.constant 0 : i32
    return %c0_i32, %c0_i32_0 : i32, i32
  }
  func.func @transform_8(%arg0: i32) -> (i32, i32) {
    %c0_i32 = arith.constant 0 : i32
    %c0_i32_0 = arith.constant 0 : i32
    %c0_i32_1 = arith.constant 0 : i32
    return %c0_i32, %c0_i32_0 : i32, i32
  }
  func.func @transform_9(%arg0: i32) -> (i32, i32) {
    %c0_i32 = arith.constant 0 : i32
    %c0_i32_0 = arith.constant 0 : i32
    %c0_i32_1 = arith.constant 0 : i32
    return %c0_i32, %c0_i32_0 : i32, i32
  }
  func.func @transform_10(%arg0: i32) -> (i32, i32, i32) {
    %c0_i32 = arith.constant 0 : i32
    %c0_i32_0 = arith.constant 0 : i32
    %c0_i32_1 = arith.constant 0 : i32
    return %arg0, %c0_i32, %c0_i32_0 : i32, i32, i32
  }
}

</mosaic_0001>

<llo_original>
// kernel: tpu_custom_call.1
$region0: #{tpu_custom_call.1}
  #allocation0 [shape = 'u32[]', space=smem, size = 0x4, offset = 0x4, fixed_abs, tag = 'smem constant byte address 0x4 - core index']
  #allocation1 [shape = 'u32[144,128]{1,0:T(1,128)}', space=vmem, size = 0x12000, scoped, tag = 'internal scratch']
  %s0 = inlined_call_operand.vmem [shape: f32[2,8,16], index: 0, kind: input, shape index: {}]
  %s1 = inlined_call_operand.vmem [shape: f32[8,8], index: 1, kind: input, shape index: {}]
  %s2 = inlined_call_operand.vmem [shape: f32[1,8], index: 2, kind: input, shape index: {}]
  %s3 = inlined_call_operand.vmem [shape: f32[8,8], index: 3, kind: input, shape index: {}]
  %s4 = inlined_call_operand.vmem [shape: f32[1,8], index: 4, kind: input, shape index: {}]
  %s5 = inlined_call_operand.vmem [shape: f32[8,8,4], index: 5, kind: input, shape index: {}]
  %s6 = inlined_call_operand.vmem [shape: f32[1,4], index: 6, kind: input, shape index: {}]
  %s7 = inlined_call_operand.vmem [shape: f32[8,8], index: 7, kind: input, shape index: {}]
  %s8 = inlined_call_operand.vmem [shape: f32[4,8], index: 8, kind: input, shape index: {}]
  %s9 = inlined_call_operand.vmem [shape: f32[1,8], index: 9, kind: input, shape index: {}]
  %s10 = inlined_call_operand.hbm [shape: f32[2,8,16], index: 10, kind: output, shape index: {}]
  %s11 = sld [smem:[#allocation0]]
  $region73: #{tpu_custom_call.1} parent=0
    _
  %s13 = ssub.s32 1, %s11
  %s14 = scalar_select 0, %s13, %s11
  $region1: #{tpu_custom_call.1} parent=0
    #allocation2 [shape = 'u8[8192]{0}', space=vmem, size = 0x2000, scoped, tag = 'output window, operand 0']
    #allocation3 [shape = 's32[2]{0}', space=sflag, size = 0x8, scoped, tag = 'scoped memory for tpu_custom_call.1']
    %15 = vsyncpa [#allocation3], 0
    %s16 = scalar_lea.sflag [#allocation3], 1
    %17 = vsyncpa %s16, 0
    loop: start=0, step=1, limit=4
    $region2: #{tpu_custom_call.1} parent=1 // loop_pre_header
      _
    $region3: #{tpu_custom_call.1} parent=1 // loop_header
      %s19 = sphi 0, %s23
      %p20 = scmp.ge.s32.totalorder %s19, 4
      %s29 = sphi 0, %s31
      %s32 = sphi 0, %s29
      %s33 = sphi 0, %s32
      %s49 = sphi 0, %s33
      %s53 = sphi 0, %s53
      %s55 = sphi 0, %s53
      %s56 = sphi 0, %s55
      %s70 = sphi 0, %s56
      %s74 = sphi 0, %s74
      %s76 = sphi 0, %s74
      %s77 = sphi 0, %s76
      %s91 = sphi 0, %s77
      %s95 = sphi 0, %s95
      %s97 = sphi 0, %s95
      %s98 = sphi 0, %s97
      %s112 = sphi 0, %s98
      %s116 = sphi 0, %s116
      %s118 = sphi 0, %s116
      %s119 = sphi 0, %s118
      %s133 = sphi 0, %s119
      %s137 = sphi 0, %s137
      %s139 = sphi 0, %s137
      %s140 = sphi 0, %s139
      %s154 = sphi 0, %s140
      %s158 = sphi 0, %s158
      %s160 = sphi 0, %s158
      %s161 = sphi 0, %s160
      %s175 = sphi 0, %s161
      %s179 = sphi 0, %s179
      %s181 = sphi 0, %s179
      %s182 = sphi 0, %s181
      %s196 = sphi 0, %s182
      %s200 = sphi 0, %s200
      %s202 = sphi 0, %s200
      %s203 = sphi 0, %s202
      %s217 = sphi 0, %s203
      %s221 = sphi 0, %s221
      %s223 = sphi 0, %s221
      %s224 = sphi 0, %s223
      %s238 = sphi 0, %s224
      %s244 = sphi 0, %s246
      %s247 = sphi 0, %s244
      %s248 = sphi 0, %s247
      %s264 = sphi 0, %s248
    $region4: #{tpu_custom_call.1} parent=1 // loop_header_branch
      %22 = sbr.rel (%p20) target = $region8
    $region5: #{tpu_custom_call.1} parent=1 // loop_body
      %s24 = ssub.s32 %s19, 1
      %s25 = ssub.s32 %s19, 2
      %s26 = sadd.s32 %s19, 1
      %s27 = ssub.s32 %s19, %s26
      %p28 = scmp.eq.s32.totalorder %s27, 0
      %s30 = sadd.s32 %s29, 1
      %s31 = scalar_select %p28, %s29, %s30
      %p34 = pneg %p28
      %p35 = scmp.eq.s32.totalorder %s19, 1
      %p36 = por %p34, %p35
      %p37 = scmp.ne.s32.totalorder %s29, %s32
      %p38 = scmp.eq.s32.totalorder %s19, 0
      %p39 = por %p37, %p38
      %p40 = scmp.ne.s32.totalorder %s29, %s32
      %p41 = scmp.eq.s32.totalorder %s24, 1
      %p42 = por %p40, %p41
      %p43 = scmp.ne.s32.totalorder %s32, %s33
      %p44 = scmp.eq.s32.totalorder %s24, 0
      %p45 = por %p43, %p44
      %p46 = scmp.ne.s32.totalorder %s32, %s33
      %p47 = scmp.eq.s32.totalorder %s25, 1
      %p48 = por %p46, %p47
      %p50 = scmp.ne.s32.totalorder %s33, %s49
      %p51 = scmp.eq.s32.totalorder %s25, 0
      %p52 = por %p50, %p51
      %s54 = sadd.s32 %s53, 1
      %p57 = scmp.eq.s32.totalorder %s19, 1
      %p58 = scmp.ne.s32.totalorder %s53, %s55
      %p59 = scmp.eq.s32.totalorder %s19, 0
      %p60 = por %p58, %p59
      %p61 = scmp.ne.s32.totalorder %s53, %s55
      %p62 = scmp.eq.s32.totalorder %s24, 1
      %p63 = por %p61, %p62
      %p64 = scmp.ne.s32.totalorder %s55, %s56
      %p65 = scmp.eq.s32.totalorder %s24, 0
      %p66 = por %p64, %p65
      %p67 = scmp.ne.s32.totalorder %s55, %s56
      %p68 = scmp.eq.s32.totalorder %s25, 1
      %p69 = por %p67, %p68
      %p71 = scmp.ne.s32.totalorder %s56, %s70
      %p72 = scmp.eq.s32.totalorder %s25, 0
      %p73 = por %p71, %p72
      %s75 = sadd.s32 %s74, 1
      %p78 = scmp.eq.s32.totalorder %s19, 1
      %p79 = scmp.ne.s32.totalorder %s74, %s76
      %p80 = scmp.eq.s32.totalorder %s19, 0
      %p81 = por %p79, %p80
      %p82 = scmp.ne.s32.totalorder %s74, %s76
      %p83 = scmp.eq.s32.totalorder %s24, 1
      %p84 = por %p82, %p83
      %p85 = scmp.ne.s32.totalorder %s76, %s77
      %p86 = scmp.eq.s32.totalorder %s24, 0
      %p87 = por %p85, %p86
      %p88 = scmp.ne.s32.totalorder %s76, %s77
      %p89 = scmp.eq.s32.totalorder %s25, 1
      %p90 = por %p88, %p89
      %p92 = scmp.ne.s32.totalorder %s77, %s91
      %p93 = scmp.eq.s32.totalorder %s25, 0
      %p94 = por %p92, %p93
      %s96 = sadd.s32 %s95, 1
      %p99 = scmp.eq.s32.totalorder %s19, 1
      %p100 = scmp.ne.s32.totalorder %s95, %s97
      %p101 = scmp.eq.s32.totalorder %s19, 0
      %p102 = por %p100, %p101
      %p103 = scmp.ne.s32.totalorder %s95, %s97
      %p104 = scmp.eq.s32.totalorder %s24, 1
      %p105 = por %p103, %p104
      %p106 = scmp.ne.s32.totalorder %s97, %s98
      %p107 = scmp.eq.s32.totalorder %s24, 0
      %p108 = por %p106, %p107
      %p109 = scmp.ne.s32.totalorder %s97, %s98
      %p110 = scmp.eq.s32.totalorder %s25, 1
      %p111 = por %p109, %p110
      %p113 = scmp.ne.s32.totalorder %s98, %s112
      %p114 = scmp.eq.s32.totalorder %s25, 0
      %p115 = por %p113, %p114
      %s117 = sadd.s32 %s116, 1
      %p120 = scmp.eq.s32.totalorder %s19, 1
      %p121 = scmp.ne.s32.totalorder %s116, %s118
      %p122 = scmp.eq.s32.totalorder %s19, 0
      %p123 = por %p121, %p122
      %p124 = scmp.ne.s32.totalorder %s116, %s118
      %p125 = scmp.eq.s32.totalorder %s24, 1
      %p126 = por %p124, %p125
      %p127 = scmp.ne.s32.totalorder %s118, %s119
      %p128 = scmp.eq.s32.totalorder %s24, 0
      %p129 = por %p127, %p128
      %p130 = scmp.ne.s32.totalorder %s118, %s119
      %p131 = scmp.eq.s32.totalorder %s25, 1
      %p132 = por %p130, %p131
      %p134 = scmp.ne.s32.totalorder %s119, %s133
      %p135 = scmp.eq.s32.totalorder %s25, 0
      %p136 = por %p134, %p135
      %s138 = sadd.s32 %s137, 1
      %p141 = scmp.eq.s32.totalorder %s19, 1
      %p142 = scmp.ne.s32.totalorder %s137, %s139
      %p143 = scmp.eq.s32.totalorder %s19, 0
      %p144 = por %p142, %p143
      %p145 = scmp.ne.s32.totalorder %s137, %s139
      %p146 = scmp.eq.s32.totalorder %s24, 1
      %p147 = por %p145, %p146
      %p148 = scmp.ne.s32.totalorder %s139, %s140
      %p149 = scmp.eq.s32.totalorder %s24, 0
      %p150 = por %p148, %p149
      %p151 = scmp.ne.s32.totalorder %s139, %s140
      %p152 = scmp.eq.s32.totalorder %s25, 1
      %p153 = por %p151, %p152
      %p155 = scmp.ne.s32.totalorder %s140, %s154
      %p156 = scmp.eq.s32.totalorder %s25, 0
      %p157 = por %p155, %p156
      %s159 = sadd.s32 %s158, 1
      %p162 = scmp.eq.s32.totalorder %s19, 1
      %p163 = scmp.ne.s32.totalorder %s158, %s160
      %p164 = scmp.eq.s32.totalorder %s19, 0
      %p165 = por %p163, %p164
      %p166 = scmp.ne.s32.totalorder %s158, %s160
      %p167 = scmp.eq.s32.totalorder %s24, 1
      %p168 = por %p166, %p167
      %p169 = scmp.ne.s32.totalorder %s160, %s161
      %p170 = scmp.eq.s32.totalorder %s24, 0
      %p171 = por %p169, %p170
      %p172 = scmp.ne.s32.totalorder %s160, %s161
      %p173 = scmp.eq.s32.totalorder %s25, 1
      %p174 = por %p172, %p173
      %p176 = scmp.ne.s32.totalorder %s161, %s175
      %p177 = scmp.eq.s32.totalorder %s25, 0
      %p178 = por %p176, %p177
      %s180 = sadd.s32 %s179, 1
      %p183 = scmp.eq.s32.totalorder %s19, 1
      %p184 = scmp.ne.s32.totalorder %s179, %s181
      %p185 = scmp.eq.s32.totalorder %s19, 0
      %p186 = por %p184, %p185
      %p187 = scmp.ne.s32.totalorder %s179, %s181
      %p188 = scmp.eq.s32.totalorder %s24, 1
      %p189 = por %p187, %p188
      %p190 = scmp.ne.s32.totalorder %s181, %s182
      %p191 = scmp.eq.s32.totalorder %s24, 0
      %p192 = por %p190, %p191
      %p193 = scmp.ne.s32.totalorder %s181, %s182
      %p194 = scmp.eq.s32.totalorder %s25, 1
      %p195 = por %p193, %p194
      %p197 = scmp.ne.s32.totalorder %s182, %s196
      %p198 = scmp.eq.s32.totalorder %s25, 0
      %p199 = por %p197, %p198
      %s201 = sadd.s32 %s200, 1
      %p204 = scmp.eq.s32.totalorder %s19, 1
      %p205 = scmp.ne.s32.totalorder %s200, %s202
      %p206 = scmp.eq.s32.totalorder %s19, 0
      %p207 = por %p205, %p206
      %p208 = scmp.ne.s32.totalorder %s200, %s202
      %p209 = scmp.eq.s32.totalorder %s24, 1
      %p210 = por %p208, %p209
      %p211 = scmp.ne.s32.totalorder %s202, %s203
      %p212 = scmp.eq.s32.totalorder %s24, 0
      %p213 = por %p211, %p212
      %p214 = scmp.ne.s32.totalorder %s202, %s203
      %p215 = scmp.eq.s32.totalorder %s25, 1
      %p216 = por %p214, %p215
      %p218 = scmp.ne.s32.totalorder %s203, %s217
      %p219 = scmp.eq.s32.totalorder %s25, 0
      %p220 = por %p218, %p219
      %s222 = sadd.s32 %s221, 1
      %p225 = scmp.eq.s32.totalorder %s19, 1
      %p226 = scmp.ne.s32.totalorder %s221, %s223
      %p227 = scmp.eq.s32.totalorder %s19, 0
      %p228 = por %p226, %p227
      %p229 = scmp.ne.s32.totalorder %s221, %s223
      %p230 = scmp.eq.s32.totalorder %s24, 1
      %p231 = por %p229, %p230
      %p232 = scmp.ne.s32.totalorder %s223, %s224
      %p233 = scmp.eq.s32.totalorder %s24, 0
      %p234 = por %p232, %p233
      %p235 = scmp.ne.s32.totalorder %s223, %s224
      %p236 = scmp.eq.s32.totalorder %s25, 1
      %p237 = por %p235, %p236
      %p239 = scmp.ne.s32.totalorder %s224, %s238
      %p240 = scmp.eq.s32.totalorder %s25, 0
      %p241 = por %p239, %p240
      %s242 = ssub.s32 %s19, %s26
      %p243 = scmp.eq.s32.totalorder %s242, 0
      %s245 = sadd.s32 %s244, 1
      %s246 = scalar_select %p243, %s244, %s245
      %p249 = pneg %p243
      %p250 = scmp.eq.s32.totalorder %s19, 1
      %p251 = por %p249, %p250
      %p252 = scmp.ne.s32.totalorder %s244, %s247
      %p253 = scmp.eq.s32.totalorder %s19, 0
      %p254 = por %p252, %p253
      %p255 = scmp.ne.s32.totalorder %s244, %s247
      %p256 = scmp.eq.s32.totalorder %s24, 1
      %p257 = por %p255, %p256
      %p258 = scmp.ne.s32.totalorder %s247, %s248
      %p259 = scmp.eq.s32.totalorder %s24, 0
      %p260 = por %p258, %p259
      %p261 = scmp.ne.s32.totalorder %s247, %s248
      %p262 = scmp.eq.s32.totalorder %s25, 1
      %p263 = por %p261, %p262
      %p265 = scmp.ne.s32.totalorder %s248, %s264
      %p266 = scmp.eq.s32.totalorder %s25, 0
      %p267 = por %p265, %p266
      %p268 = scmp.le.s32.totalorder 1, %s19
      %p269 = scmp.lt.s32.totalorder %s19, 3
      %p270 = pnand %p268, %p269
      %p271 = pneg %p270
      // Predicated region
      $region9: #{tpu_custom_call.1} parent=5 // pred_check
        _
      $region10: #{tpu_custom_call.1} parent=5 // pred_check_branch
        %273 = sbr.rel (%p270) target = $region12
      $region11: #{tpu_custom_call.1} parent=5 // pred_region
        %s274 = ssub.s32 %s19, 1
        // Predicated region
        $region13: #{tpu_custom_call.1} parent=11 // pred_check
          %p275 = pneg %p66
        $region14: #{tpu_custom_call.1} parent=11 // pred_check_branch
          %277 = sbr.rel (%p275) target = $region16
        $region15: #{tpu_custom_call.1} parent=11 // pred_region
          _
        $region16: #{tpu_custom_call.1} parent=11 // pred_fallthru
          _
        // Predicated region
        $region17: #{tpu_custom_call.1} parent=11 // pred_check
          %p278 = pneg %p87
        $region18: #{tpu_custom_call.1} parent=11 // pred_check_branch
          %280 = sbr.rel (%p278) target = $region20
        $region19: #{tpu_custom_call.1} parent=11 // pred_region
          _
        $region20: #{tpu_custom_call.1} parent=11 // pred_fallthru
          _
        // Predicated region
        $region21: #{tpu_custom_call.1} parent=11 // pred_check
          %p281 = pneg %p108
        $region22: #{tpu_custom_call.1} parent=11 // pred_check_branch
          %283 = sbr.rel (%p281) target = $region24
        $region23: #{tpu_custom_call.1} parent=11 // pred_region
          _
        $region24: #{tpu_custom_call.1} parent=11 // pred_fallthru
          _
        // Predicated region
        $region25: #{tpu_custom_call.1} parent=11 // pred_check
          %p284 = pneg %p129
        $region26: #{tpu_custom_call.1} parent=11 // pred_check_branch
          %286 = sbr.rel (%p284) target = $region28
        $region27: #{tpu_custom_call.1} parent=11 // pred_region
          _
        $region28: #{tpu_custom_call.1} parent=11 // pred_fallthru
          _
        // Predicated region
        $region29: #{tpu_custom_call.1} parent=11 // pred_check
          %p287 = pneg %p150
        $region30: #{tpu_custom_call.1} parent=11 // pred_check_branch
          %289 = sbr.rel (%p287) target = $region32
        $region31: #{tpu_custom_call.1} parent=11 // pred_region
          _
        $region32: #{tpu_custom_call.1} parent=11 // pred_fallthru
          _
        // Predicated region
        $region33: #{tpu_custom_call.1} parent=11 // pred_check
          %p290 = pneg %p171
        $region34: #{tpu_custom_call.1} parent=11 // pred_check_branch
          %292 = sbr.rel (%p290) target = $region36
        $region35: #{tpu_custom_call.1} parent=11 // pred_region
          _
        $region36: #{tpu_custom_call.1} parent=11 // pred_fallthru
          _
        // Predicated region
        $region37: #{tpu_custom_call.1} parent=11 // pred_check
          %p293 = pneg %p192
        $region38: #{tpu_custom_call.1} parent=11 // pred_check_branch
          %295 = sbr.rel (%p293) target = $region40
        $region39: #{tpu_custom_call.1} parent=11 // pred_region
          _
        $region40: #{tpu_custom_call.1} parent=11 // pred_fallthru
          _
        // Predicated region
        $region41: #{tpu_custom_call.1} parent=11 // pred_check
          %p296 = pneg %p213
        $region42: #{tpu_custom_call.1} parent=11 // pred_check_branch
          %298 = sbr.rel (%p296) target = $region44
        $region43: #{tpu_custom_call.1} parent=11 // pred_region
          _
        $region44: #{tpu_custom_call.1} parent=11 // pred_fallthru
          _
        // Predicated region
        $region45: #{tpu_custom_call.1} parent=11 // pred_check
          %p299 = pneg %p234
        $region46: #{tpu_custom_call.1} parent=11 // pred_check_branch
          %301 = sbr.rel (%p299) target = $region48
        $region47: #{tpu_custom_call.1} parent=11 // pred_region
          _
        $region48: #{tpu_custom_call.1} parent=11 // pred_fallthru
          _
      $region12: #{tpu_custom_call.1} parent=5 // pred_fallthru
        _
      %p302 = scmp.lt.s32.totalorder %s19, 2
      // Predicated region
      $region49: #{tpu_custom_call.1} parent=5 // pred_check
        %p303 = pneg %p302
      $region50: #{tpu_custom_call.1} parent=5 // pred_check_branch
        %305 = sbr.rel (%p303) target = $region52
      $region51: #{tpu_custom_call.1} parent=5 // pred_region
        // Predicated region
        $region53: #{tpu_custom_call.1} parent=51 // pred_check
          %p306 = pneg %p39
        $region54: #{tpu_custom_call.1} parent=51 // pred_check_branch
          %308 = sbr.rel (%p306) target = $region56
        $region55: #{tpu_custom_call.1} parent=51 // pred_region
          %p309 = scmp.lt.s32.totalorder %s19, 1
          %s310 = scalar_select %p309, %s19, 1
          %s311 = smul.addr %s310, 8
          %s312 = scalar_lea.vmem %s0, %s311
        $region56: #{tpu_custom_call.1} parent=51 // pred_fallthru
          _
      $region52: #{tpu_custom_call.1} parent=5 // pred_fallthru
        _
      %p313 = scmp.le.s32.totalorder 1, %s19
      %p314 = scmp.lt.s32.totalorder %s19, 3
      %p315 = pnand %p313, %p314
      %p316 = pneg %p315
      // Predicated region
      $region57: #{tpu_custom_call.1} parent=5 // pred_check
        _
      $region58: #{tpu_custom_call.1} parent=5 // pred_check_branch
        %318 = sbr.rel (%p315) target = $region60
      $region59: #{tpu_custom_call.1} parent=5 // pred_region
        %s319 = ssub.s32 %s19, 1
        %p320 = scmp.lt.s32.totalorder %s24, 1
        %s321 = scalar_select %p320, %s24, 1
        %s322 = smul.addr %s321, 8
        %s323 = scalar_lea.vmem %s0, %s322
        %p324 = pneg %p45
        %p325 = pneg %p42
        %p326 = pneg %p66
        %p327 = pneg %p63
        %p328 = pneg %p87
        %p329 = pneg %p84
        %p330 = pneg %p108
        %p331 = pneg %p105
        %p332 = pneg %p129
        %p333 = pneg %p126
        %p334 = pneg %p150
        %p335 = pneg %p147
        %p336 = pneg %p171
        %p337 = pneg %p168
        %p338 = pneg %p192
        %p339 = pneg %p189
        %p340 = pneg %p213
        %p341 = pneg %p210
        %p342 = pneg %p234
        %p343 = pneg %p231
        %p344 = pneg %p260
        %p345 = pneg %p257
        %s346 = sand.u32 %s247, 1
        %s347 = scalar_lea.sflag [#allocation3], %s346
        %s348 = sand.u32 %s247, 1
        %s349 = smul.addr %s348, 8
        %s350 = scalar_lea.vmem [#allocation2], %s349
        %p351 = scmp.lt.s32.totalorder %s24, 1
        %s352 = scalar_select %p351, %s24, 1
        %s353 = smul.addr %s352, 8
        %s354 = scalar_lea.vmem %s0, %s353
        %v355 = vld [vmem:[%s354] sm:$0xff]
        %vm356 = vcmask 130048
        %v357 = vsel %vm356, %v355, 0.0
        %358 = vadd.xlane.f32.xlu0 %v357
        %v359 = vpop.xlane.xlu0 %358
        %v360 = vmul.f32 %v359, 0.0625
        %v361 = vld [vmem:[%s1] sm:$0xff]
        %v362 = vld [vmem:[%s2] sm:$0x1]
        %v363 = vld [vmem:[%s3] sm:$0xff]
        %v364 = vld [vmem:[%s4] sm:$0x1]
        %v365 = vld [vmem:[%s5] sm:$0xff]
        %v366 = vld [vmem:[%s5 + $0x8] sm:$0xff]
        %v367 = vld [vmem:[%s5 + $0x10] sm:$0xff]
        %v368 = vld [vmem:[%s5 + $0x18] sm:$0xff]
        %v369 = vld [vmem:[%s5 + $0x20] sm:$0xff]
        %v370 = vld [vmem:[%s5 + $0x28] sm:$0xff]
        %v371 = vld [vmem:[%s5 + $0x30] sm:$0xff]
        %v372 = vld [vmem:[%s5 + $0x38] sm:$0xff]
        %v373 = vld [vmem:[%s6] sm:$0x1]
        %v374 = vld [vmem:[%s7] sm:$0xff]
        %v375 = vld [vmem:[%s8] sm:$0xf]
        %v376 = vld [vmem:[%s9] sm:$0x1]
        %v377 = vmul.f32 %v360, %v361
        %vm378 = vcmask 64512
        %v379 = vsel %vm378, %v377, 0.0
        %v380 = vrot.slane %v379, 4
        %v381 = vadd.f32 %v379, %v380
        %v382 = vrot.slane %v381, 2
        %v383 = vadd.f32 %v381, %v382
        %v384 = vrot.slane %v383, 1
        %v385 = vadd.f32 %v383, %v384
        %v386 = vadd.f32 %v385, %v362
        %v387 = vxor.u32 %v386, 2147483648
        %v388 = vmul.f32 %v387, 1.442695
        %v389 = vpow.pop %v388
        %v390 = vadd.f32 %v389, 1.0
        %v391 = vrcp.pop %v390
        %v392 = vmul.f32 1.0, %v391
        %v393 = vmul.f32 %v386, %v392
        %v394 = vlaneseq
        %v395 = vshrl.u32 %v394, 7
        %v396 = vsub.s32 0, %v395
        %v397 = vrot.slane %v393, %v396
        %399 = vbcast.lane.b32.xlu0 %v397, 256
        %v400 = vpop.permute.xlu0 %399
        %v401 = vmul.f32 %v400, %v363
        %v402 = vsel %vm378, %v401, 0.0
        %v403 = vrot.slane %v402, 4
        %v404 = vadd.f32 %v402, %v403
        %v405 = vrot.slane %v404, 2
        %v406 = vadd.f32 %v404, %v405
        %v407 = vrot.slane %v406, 1
        %v408 = vadd.f32 %v406, %v407
        %v409 = vadd.f32 %v408, %v364
        %v410 = vlaneseq
        %v411 = vshrl.u32 %v410, 7
        %v412 = vsub.s32 0, %v411
        %v413 = vrot.slane %v409, %v412
        %415 = vbcast.lane.b32.xlu0 %v413, 256
        %v416 = vpop.permute.xlu0 %415
        %v417 = vmul.f32 %v416, %v365
        %vm418 = vcmask 31744
        %v419 = vsel %vm418, %v417, 0.0
        %v420 = vrot.slane %v419, 4
        %v421 = vadd.f32 %v419, %v420
        %v422 = vrot.slane %v421, 2
        %v423 = vadd.f32 %v421, %v422
        %v424 = vrot.slane %v423, 1
        %v425 = vadd.f32 %v423, %v424
        %427 = vset.pattern.permute.xlu0 0
        %428 = vperm.xlu0 %427, %v409
        %v429 = vpop.permute.xlu0 %428
        %v431 = vmul.f32 %v429, %v425
        %v432 = vadd.f32 %v431, 0.0
        %v433 = vmul.f32 %v416, %v366
        %v434 = vsel %vm418, %v433, 0.0
        %v435 = vrot.slane %v434, 4
        %v436 = vadd.f32 %v434, %v435
        %v437 = vrot.slane %v436, 2
        %v438 = vadd.f32 %v436, %v437
        %v439 = vrot.slane %v438, 1
        %v440 = vadd.f32 %v438, %v439
        %441 = vset.pattern.permute.xlu0 1
        %442 = vperm.xlu0 %441, %v409
        %v443 = vpop.permute.xlu0 %442
        %v445 = vmul.f32 %v443, %v440
        %v446 = vadd.f32 %v432, %v445
        %v447 = vmul.f32 %v416, %v367
        %v448 = vsel %vm418, %v447, 0.0
        %v449 = vrot.slane %v448, 4
        %v450 = vadd.f32 %v448, %v449
        %v451 = vrot.slane %v450, 2
        %v452 = vadd.f32 %v450, %v451
        %v453 = vrot.slane %v452, 1
        %v454 = vadd.f32 %v452, %v453
        %455 = vset.pattern.permute.xlu0 2
        %456 = vperm.xlu0 %455, %v409
        %v457 = vpop.permute.xlu0 %456
        %v459 = vmul.f32 %v457, %v454
        %v460 = vadd.f32 %v446, %v459
        %v461 = vmul.f32 %v416, %v368
        %v462 = vsel %vm418, %v461, 0.0
        %v463 = vrot.slane %v462, 4
        %v464 = vadd.f32 %v462, %v463
        %v465 = vrot.slane %v464, 2
        %v466 = vadd.f32 %v464, %v465
        %v467 = vrot.slane %v466, 1
        %v468 = vadd.f32 %v466, %v467
        %469 = vset.pattern.permute.xlu0 3
        %470 = vperm.xlu0 %469, %v409
        %v471 = vpop.permute.xlu0 %470
        %v473 = vmul.f32 %v471, %v468
        %v474 = vadd.f32 %v460, %v473
        %v475 = vmul.f32 %v416, %v369
        %v476 = vsel %vm418, %v475, 0.0
        %v477 = vrot.slane %v476, 4
        %v478 = vadd.f32 %v476, %v477
        %v479 = vrot.slane %v478, 2
        %v480 = vadd.f32 %v478, %v479
        %v481 = vrot.slane %v480, 1
        %v482 = vadd.f32 %v480, %v481
        %483 = vset.pattern.permute.xlu0 4
        %484 = vperm.xlu0 %483, %v409
        %v485 = vpop.permute.xlu0 %484
        %v487 = vmul.f32 %v485, %v482
        %v488 = vadd.f32 %v474, %v487
        %v489 = vmul.f32 %v416, %v370
        %v490 = vsel %vm418, %v489, 0.0
        %v491 = vrot.slane %v490, 4
        %v492 = vadd.f32 %v490, %v491
        %v493 = vrot.slane %v492, 2
        %v494 = vadd.f32 %v492, %v493
        %v495 = vrot.slane %v494, 1
        %v496 = vadd.f32 %v494, %v495
        %497 = vset.pattern.permute.xlu0 5
        %498 = vperm.xlu0 %497, %v409
        %v499 = vpop.permute.xlu0 %498
        %v501 = vmul.f32 %v499, %v496
        %v502 = vadd.f32 %v488, %v501
        %v503 = vmul.f32 %v416, %v371
        %v504 = vsel %vm418, %v503, 0.0
        %v505 = vrot.slane %v504, 4
        %v506 = vadd.f32 %v504, %v505
        %v507 = vrot.slane %v506, 2
        %v508 = vadd.f32 %v506, %v507
        %v509 = vrot.slane %v508, 1
        %v510 = vadd.f32 %v508, %v509
        %511 = vset.pattern.permute.xlu0 6
        %512 = vperm.xlu0 %511, %v409
        %v513 = vpop.permute.xlu0 %512
        %v515 = vmul.f32 %v513, %v510
        %v516 = vadd.f32 %v502, %v515
        %v517 = vmul.f32 %v416, %v372
        %v518 = vsel %vm418, %v517, 0.0
        %v519 = vrot.slane %v518, 4
        %v520 = vadd.f32 %v518, %v519
        %v521 = vrot.slane %v520, 2
        %v522 = vadd.f32 %v520, %v521
        %v523 = vrot.slane %v522, 1
        %v524 = vadd.f32 %v522, %v523
        %525 = vset.pattern.permute.xlu0 7
        %526 = vperm.xlu0 %525, %v409
        %v527 = vpop.permute.xlu0 %526
        %v529 = vmul.f32 %v527, %v524
        %v530 = vadd.f32 %v516, %v529
        %v531 = vadd.f32 %v530, %v373
        %v532 = vxor.u32 %v409, 2147483648
        %v533 = vmul.f32 %v532, 1.442695
        %v534 = vpow.pop %v533
        %v535 = vadd.f32 %v534, 1.0
        %v536 = vrcp.pop %v535
        %v537 = vmul.f32 1.0, %v536
        %v538 = vmul.f32 %v409, %v537
        %v539 = vlaneseq
        %v540 = vshrl.u32 %v539, 7
        %v541 = vsub.s32 0, %v540
        %v542 = vrot.slane %v538, %v541
        %544 = vbcast.lane.b32.xlu0 %v542, 256
        %v545 = vpop.permute.xlu0 %544
        %v546 = vmul.f32 %v545, %v374
        %v547 = vsel %vm378, %v546, 0.0
        %v548 = vrot.slane %v547, 4
        %v549 = vadd.f32 %v547, %v548
        %v550 = vrot.slane %v549, 2
        %v551 = vadd.f32 %v549, %v550
        %v552 = vrot.slane %v551, 1
        %v553 = vadd.f32 %v551, %v552
        %v554 = vxor.u32 %v531, 2147483648
        %v555 = vmul.f32 %v554, 1.442695
        %v556 = vpow.pop %v555
        %v557 = vadd.f32 %v556, 1.0
        %v558 = vrcp.pop %v557
        %v559 = vmul.f32 1.0, %v558
        %v560 = vmul.f32 %v531, %v559
        %v561 = vlaneseq
        %v562 = vshrl.u32 %v561, 7
        %v563 = vsub.s32 0, %v562
        %v564 = vrot.slane %v560, %v563
        %566 = vbcast.lane.b32.xlu0 %v564, 256
        %v567 = vpop.permute.xlu0 %566
        %v568 = vmul.f32 %v567, %v375
        %vm569 = vcmask 60416
        %v570 = vsel %vm569, %v568, 0.0
        %v571 = vrot.slane %v570, 4
        %v572 = vadd.f32 %v570, %v571
        %v573 = vrot.slane %v572, 2
        %v574 = vadd.f32 %v572, %v573
        %v575 = vrot.slane %v574, 1
        %v576 = vadd.f32 %v574, %v575
        %v577 = vadd.f32 %v553, %v576
        %v578 = vadd.f32 %v577, %v376
        %v579 = vxor.u32 %v578, 2147483648
        %v580 = vmul.f32 %v579, 1.442695
        %v581 = vpow.pop %v580
        %v582 = vadd.f32 %v581, 1.0
        %v583 = vrcp.pop %v582
        %v584 = vmul.f32 1.0, %v583
        %v585 = vlaneseq
        %v586 = vshrl.u32 %v585, 7
        %v587 = vsub.s32 0, %v586
        %v588 = vrot.slane %v584, %v587
        %590 = vbcast.lane.b32.xlu0 %v588, 256
        %v591 = vpop.permute.xlu0 %590
        %v592 = vmul.f32 %v355, %v591
        %593 = vst.msk [vmem:[%s350] sm:$0xff] %vm356, %v592
        %s594 = sand.u32 %s247, 1
        %s595 = scalar_lea.sflag [#allocation3], %s594
        %s596 = sand.u32 %s247, 1
        %s597 = smul.addr %s596, 8
        %s598 = scalar_lea.vmem [#allocation2], %s597
        // Predicated region
        $region61: #{tpu_custom_call.1} parent=59 // pred_check
          %p599 = pneg %p257
        $region62: #{tpu_custom_call.1} parent=59 // pred_check_branch
          %601 = sbr.rel (%p599) target = $region64
        $region63: #{tpu_custom_call.1} parent=59 // pred_region
          %s603 = ssub.s32 128, 128
          %604 = vsyncadd %s595, %s603
          %s605 = smul.addr %s24, 128
          %s606 = scalar_lea.hbm %s10, %s605
          %s608 = sshll.u32 %s598, 4
          %s609 = int_to_ptr.vmem [resolvable:$true] %s608
          %611 = dma.vmem_to_hbm [thread:$0]  %s609, 128, %s606, %s595
        $region64: #{tpu_custom_call.1} parent=59 // pred_fallthru
          _
      $region60: #{tpu_custom_call.1} parent=5 // pred_fallthru
        _
      %p612 = scmp.le.s32.totalorder 2, %s19
      // Predicated region
      $region65: #{tpu_custom_call.1} parent=5 // pred_check
        %p613 = pneg %p612
      $region66: #{tpu_custom_call.1} parent=5 // pred_check_branch
        %615 = sbr.rel (%p613) target = $region68
      $region67: #{tpu_custom_call.1} parent=5 // pred_region
        %s616 = ssub.s32 %s19, 2
        // Predicated region
        $region69: #{tpu_custom_call.1} parent=67 // pred_check
          %p617 = pneg %p263
        $region70: #{tpu_custom_call.1} parent=67 // pred_check_branch
          %619 = sbr.rel (%p617) target = $region72
        $region71: #{tpu_custom_call.1} parent=67 // pred_region
          %s620 = sand.u32 %s248, 1
          %s621 = scalar_lea.sflag [#allocation3], %s620
          %s622 = sand.u32 %s248, 1
          %s623 = smul.addr %s622, 8
          %s624 = scalar_lea.vmem [#allocation2], %s623
          %625 = dma.done %s621, 128
        $region72: #{tpu_custom_call.1} parent=67 // pred_fallthru
          _
      $region68: #{tpu_custom_call.1} parent=5 // pred_fallthru
        _
    $region6: #{tpu_custom_call.1} parent=1 // loop_footer
      %s23 = sadd.s32 1, %s19
    $region7: #{tpu_custom_call.1} parent=1 // loop_footer_branch
      %18 = sbr.rel target = $region3
    $region8: #{tpu_custom_call.1} parent=1 // loop_exit
      _
    %626 = vsyncpa [#allocation3], 1
    %s627 = scalar_lea.sflag [#allocation3], 1
    %628 = vsyncpa %s627, 1

</llo_original>
